<compile_context>
chip_gen: v6e
topology: v6e:2x2x1
jax: 0.10.0
libtpu: 0.0.40
codegen_flags: <defaults>
</compile_context>

<pallas_src>
import functools

import jax
import jax.numpy as jnp
from jax.experimental import pallas as pl
from jax.experimental.pallas import tpu as pltpu

Z_DIM = 1
NUM_EMBEDDINGS = 16
N_GMM = 2
IN_DIM = 118
COMMITMENT_COST = 0.25
PACK_LANES = 128  # lane-dense merged output slab width

# merged-slab lane layout:
#   [ x_hat(0..117) | z_e | z_q | rel_euc | cos_sim | gamma(2) | sq_diff | 0*3 ]
_LANE_ZE = IN_DIM
_LANE_ZQ = IN_DIM + 1
_LANE_REL = IN_DIM + 2
_LANE_COS = IN_DIM + 3
_LANE_GAMMA = IN_DIM + 4
_LANE_SQDIFF = _LANE_GAMMA + N_GMM
_PAD_LANES = PACK_LANES - (_LANE_SQDIFF + 1)          # = 3


def _lin(h, w_ref, b_ref):
    return jnp.dot(h, w_ref[...], preferred_element_type=jnp.float32) + b_ref[...]


def dagmm_vqvae_kernel(
    # inputs
    x_ref,
    w1_ref, b1_ref, w2_ref, b2_ref, w3_ref, b3_ref, w4_ref, b4_ref,
    emb_row_ref, dec_tbl_ref,
    w9_ref, b9_ref, w10_ref, b10_ref,
    # output (merged lane-dense slab)
    out_ref,
):
    x = x_ref[...]                                            # (T, 118)
    T = x.shape[0]

    # ---------------- encoder ----------------
    h = jnp.tanh(_lin(x, w1_ref, b1_ref))                     # (T, 60)
    h = jnp.tanh(_lin(h, w2_ref, b2_ref))                     # (T, 30)
    h = jnp.tanh(_lin(h, w3_ref, b3_ref))                     # (T, 10)
    z_e = _lin(h, w4_ref, b4_ref)                             # (T, 1)

    # ---------------- VQ bottleneck (Z_DIM == 1, pure VPU) ----------------
    emb_row = emb_row_ref[...]                                # (1, E)
    dz = z_e - emb_row                                        # (T, E) broadcast
    distances = dz * dz                                       # == z^2 + e^2 - 2ze
    iota = jax.lax.broadcasted_iota(jnp.int32, distances.shape, 1)
    min_d = jnp.min(distances, axis=1, keepdims=True)
    idx = jnp.min(jnp.where(distances <= min_d, iota, NUM_EMBEDDINGS),
                  axis=1, keepdims=True)                      # first argmin
    one_hot = (iota == idx).astype(jnp.float32)               # (T, E)
    z_q = jnp.sum(one_hot * emb_row, axis=1, keepdims=True)   # (T, 1)

    # vq_loss = (1 + commitment_cost) * mse(z_q, z_e) (forward value).
    # Emitted per-row; reduced in the wrapper so the batch axis stays parallel.
    d_qe = z_q - z_e
    sq_diff = d_qe * d_qe                                     # (T, 1)

    # ---------------- decoder via precomputed 16-entry table ----------------
    x_hat = jnp.dot(one_hot, dec_tbl_ref[...],
                    preferred_element_type=jnp.float32)       # (T, 118)

    # ---------------- reconstruction features ----------------
    # dn^2 = |x|^2 + |x_hat|^2 - 2 x.x_hat  (reuses the x.x_hat reduction)
    x_sq = jnp.sum(x * x, axis=1, keepdims=True)
    xh_sq = jnp.sum(x_hat * x_hat, axis=1, keepdims=True)
    xdot = jnp.sum(x * x_hat, axis=1, keepdims=True)
    dn = jnp.sqrt(jnp.maximum(x_sq + xh_sq - 2.0 * xdot, 0.0))
    xn = jnp.sqrt(x_sq)
    rel_euc = dn * pl.reciprocal(xn + 1e-12, approx=True)     # EUP slot
    # cosine similarity; rsqrt(max(n^2, eps^2)) == 1/max(n, eps), torch eps=1e-8
    inv_xn = jax.lax.rsqrt(jnp.maximum(x_sq, 1e-16))
    inv_xhn = jax.lax.rsqrt(jnp.maximum(xh_sq, 1e-16))
    cos_sim = xdot * inv_xn * inv_xhn

    # ---------------- estimation network ----------------
    # fc9 on z_aug = [z_q, rel_euc, cos_sim]: rank-1 decomposition (K=3) on the
    # VPU; z_aug stays in vregs (no VMEM round trip, no tiny matmul).
    w9 = w9_ref[...]                                          # (3, 10)
    h9 = jnp.tanh(z_q * w9[0:1, :] + rel_euc * w9[1:2, :]
                  + cos_sim * w9[2:3, :] + b9_ref[...])       # (T, 10)
    # TODO(synk): F.dropout(p=0.5) is stochastic; implemented as eval-mode identity.
    logits = _lin(h9, w10_ref, b10_ref)                       # (T, n_gmm)
    m = jnp.max(logits, axis=1, keepdims=True)
    e = jnp.exp(logits - m)
    gamma = e / jnp.sum(e, axis=1, keepdims=True)             # exact normalization

    # ---------------- single lane-dense writeback ----------------
    out_ref[...] = jnp.concatenate(
        [x_hat, z_e, z_q, rel_euc, cos_sim, gamma, sq_diff,
         jnp.zeros((T, _PAD_LANES), jnp.float32)], axis=1)    # (T, 128) unmasked


def _round_up(n, m):
    return ((n + m - 1) // m) * m


def _choose_b_tile(B, cap):
    """Batch tile: multiple of 8, <= cap (<=1024), preferring a divisor of the
    8-rounded batch so no jnp.pad copy of x is needed, with >=2 tiles when the
    batch is large enough (keeps both v7x TensorCores busy)."""
    cap = max(8, min(_round_up(cap, 8), 1024))
    B8 = _round_up(B, 8)
    if B8 <= cap:
        return B8                                   # single tile, pad <= 7 rows
    min_tile = min(128, cap)
    for d in range(cap, min_tile - 1, -8):          # largest no-pad divisor
        if B8 % d == 0:
            return d
    return cap                                      # fallback: pad < cap rows


def _decoder_table(params):
    """decode() applied to the 16 codebook vectors -> (16, 118) table (glue)."""
    emb = params["emb"]                                       # (E, 1)
    h = jnp.tanh(emb @ params["w5"] + params["b5"])
    h = jnp.tanh(h @ params["w6"] + params["b6"])
    h = jnp.tanh(h @ params["w7"] + params["b7"])
    return h @ params["w8"] + params["b8"]                    # (E, 118)


@functools.partial(jax.jit, static_argnames=("b_tile",))
def dagmm_vqvae_forward(x, params, *, b_tile=1024):
    B = x.shape[0]
    tile = _choose_b_tile(B, b_tile)
    B_pad = _round_up(B, tile)
    x_in = x if B_pad == B else jnp.pad(x, ((0, B_pad - B), (0, 0)))
    num_tiles = B_pad // tile

    dec_table = _decoder_table(params)                        # (16, 118)
    emb_row = params["emb"].T                                 # (1, 16)

    inputs = (
        x_in,
        params["w1"], params["b1"], params["w2"], params["b2"],
        params["w3"], params["b3"], params["w4"], params["b4"],
        emb_row, dec_table,
        params["w9"], params["b9"], params["w10"], params["b10"],
    )

    def const_spec(a):
        # resident parameter: same block for every grid step -> single DMA
        return pl.BlockSpec(a.shape, lambda i: (0, 0))

    in_specs = [pl.BlockSpec((tile, IN_DIM), lambda i: (i, 0))]
    in_specs += [const_spec(a) for a in inputs[1:]]

    packed = pl.pallas_call(
        dagmm_vqvae_kernel,
        out_shape=jax.ShapeDtypeStruct((B_pad, PACK_LANES), jnp.float32),
        grid=(num_tiles,),
        in_specs=in_specs,
        out_specs=pl.BlockSpec((tile, PACK_LANES), lambda i: (i, 0)),
        compiler_params=pltpu.CompilerParams(
            dimension_semantics=("parallel",),
            vmem_limit_bytes=32 * 1024 * 1024),
    )(*inputs)

    packed = packed[:B]
    x_hat = packed[:, :IN_DIM]
    z_e = packed[:, _LANE_ZE:_LANE_ZE + Z_DIM]
    z_q = packed[:, _LANE_ZQ:_LANE_ZQ + Z_DIM]
    z_aug = packed[:, _LANE_ZQ:_LANE_COS + 1]                 # [z_q, rel_euc, cos]
    gamma = packed[:, _LANE_GAMMA:_LANE_GAMMA + N_GMM]
    vq_loss = (1.0 + COMMITMENT_COST) * jnp.mean(
        packed[:, _LANE_SQDIFF:_LANE_SQDIFF + Z_DIM])
    return {"z_e": z_e, "z_q": z_q, "vq_loss": vq_loss,
            "x_hat": x_hat, "z_aug": z_aug, "gamma": gamma}


def init_params(key):
    """Deterministic init mirroring the torch module's parameter shapes."""
    layer_dims = [
        (118, 60), (60, 30), (30, 10), (10, Z_DIM),           # fc1..fc4
        (Z_DIM, 10), (10, 30), (30, 60), (60, 118),            # fc5..fc8
        (Z_DIM + 2, 10), (10, N_GMM),                          # fc9, fc10
    ]
    keys = jax.random.split(key, 2 * len(layer_dims) + 1)
    params = {}
    for i, (din, dout) in enumerate(layer_dims):
        bound = 1.0 / float(din) ** 0.5
        params[f"w{i + 1}"] = jax.random.uniform(
            keys[2 * i], (din, dout), jnp.float32, -bound, bound)
        params[f"b{i + 1}"] = jax.random.uniform(
            keys[2 * i + 1], (1, dout), jnp.float32, -bound, bound)
    params["emb"] = jax.random.uniform(
        keys[-1], (NUM_EMBEDDINGS, Z_DIM), jnp.float32,
        -1.0 / NUM_EMBEDDINGS, 1.0 / NUM_EMBEDDINGS)
    return params


def _reference_forward(x, p):
    """Plain-JAX forward matching the torch module (eval mode)."""
    h = jnp.tanh(x @ p["w1"] + p["b1"])
    h = jnp.tanh(h @ p["w2"] + p["b2"])
    h = jnp.tanh(h @ p["w3"] + p["b3"])
    z_e = h @ p["w4"] + p["b4"]
    emb = p["emb"]
    dist = (jnp.sum(z_e ** 2, axis=1, keepdims=True)
            + jnp.sum(emb ** 2, axis=1)[None, :] - 2.0 * z_e @ emb.T)
    idx = jnp.argmin(dist, axis=1)
    z_q = emb[idx]
    vq_loss = (1.0 + COMMITMENT_COST) * jnp.mean((z_q - z_e) ** 2)
    h = jnp.tanh(z_q @ p["w5"] + p["b5"])
    h = jnp.tanh(h @ p["w6"] + p["b6"])
    h = jnp.tanh(h @ p["w7"] + p["b7"])
    x_hat = h @ p["w8"] + p["b8"]
    xn = jnp.sqrt(jnp.sum(x ** 2, axis=1, keepdims=True))
    xhn = jnp.sqrt(jnp.sum(x_hat ** 2, axis=1, keepdims=True))
    dn = jnp.sqrt(jnp.sum((x - x_hat) ** 2, axis=1, keepdims=True))
    rel_euc = dn / (xn + 1e-12)
    cos_sim = jnp.sum(x * x_hat, axis=1, keepdims=True) / (
        jnp.maximum(xn, 1e-8) * jnp.maximum(xhn, 1e-8))
    z_aug = jnp.concatenate([z_q, rel_euc, cos_sim], axis=1)
    h = jnp.tanh(z_aug @ p["w9"] + p["b9"])
    gamma = jax.nn.softmax(h @ p["w10"] + p["b10"], axis=1)
    return {"z_e": z_e, "z_q": z_q, "vq_loss": vq_loss,
            "x_hat": x_hat, "z_aug": z_aug, "gamma": gamma}


def _row_match_fraction(a, b, atol, rtol):
    ok = jnp.isclose(a, b, atol=atol, rtol=rtol).reshape(a.shape[0], -1)
    return float(jnp.mean(jnp.all(ok, axis=1).astype(jnp.float32)))


if __name__ == "__main__":
    key = jax.random.PRNGKey(0)
    kx, kp = jax.random.split(key)
    params = init_params(kp)

    # ---- small run (single tile, no padding) ----
    B = 8
    x = jax.random.normal(kx, (B, IN_DIM), jnp.float32)
    out = dagmm_vqvae_forward(x, params)
    jax.block_until_ready(out)
    ref = _reference_forward(x, params)

    assert out["z_e"].shape == (B, Z_DIM)
    assert out["z_q"].shape == (B, Z_DIM)
    assert out["x_hat"].shape == (B, IN_DIM)
    assert out["z_aug"].shape == (B, Z_DIM + 2)
    assert out["gamma"].shape == (B, N_GMM)
    assert out["vq_loss"].shape == ()
    for v in jax.tree_util.tree_leaves(out):
        assert bool(jnp.all(jnp.isfinite(v)))
    assert bool(jnp.allclose(out["z_e"], ref["z_e"], atol=2e-3, rtol=2e-3))
    assert bool(jnp.allclose(out["z_q"], ref["z_q"], atol=2e-3, rtol=2e-3))
    assert bool(jnp.allclose(out["x_hat"], ref["x_hat"], atol=1e-2, rtol=1e-2))
    assert bool(jnp.allclose(out["z_aug"], ref["z_aug"], atol=1e-2, rtol=1e-2))
    assert bool(jnp.allclose(out["gamma"], ref["gamma"], atol=1e-2))
    assert bool(jnp.allclose(out["vq_loss"], ref["vq_loss"], atol=1e-4, rtol=1e-2))
    assert bool(jnp.allclose(jnp.sum(out["gamma"], axis=1), 1.0, atol=1e-3))

    # ---- larger run: multi-tile grid, divisor-based tile (no input pad) ----
    B2 = 1000
    x2 = jax.random.normal(jax.random.PRNGKey(1), (B2, IN_DIM), jnp.float32)
    out2 = dagmm_vqvae_forward(x2, params, b_tile=256)   # tile=200, 5 tiles
    jax.block_until_ready(out2)
    ref2 = _reference_forward(x2, params)
    for v in jax.tree_util.tree_leaves(out2):
        assert bool(jnp.all(jnp.isfinite(v)))
    assert bool(jnp.allclose(out2["z_e"], ref2["z_e"], atol=2e-3, rtol=2e-3))
    # outputs downstream of argmin may flip on exact distance ties for a few
    # rows; require >= 99% of rows to match the reference.
    assert _row_match_fraction(out2["z_q"], ref2["z_q"], 2e-3, 2e-3) >= 0.99
    assert _row_match_fraction(out2["x_hat"], ref2["x_hat"], 1e-2, 1e-2) >= 0.99
    assert _row_match_fraction(out2["z_aug"], ref2["z_aug"], 1e-2, 1e-2) >= 0.99
    assert _row_match_fraction(out2["gamma"], ref2["gamma"], 1e-2, 1e-2) >= 0.99
    assert bool(jnp.allclose(out2["vq_loss"], ref2["vq_loss"], atol=1e-4, rtol=2e-2))
    assert bool(jnp.allclose(jnp.sum(out2["gamma"], axis=1), 1.0, atol=1e-3))

    # ---- non-multiple-of-8 batch: exercises the (tiny) padding path ----
    B3 = 250
    x3 = jax.random.normal(jax.random.PRNGKey(2), (B3, IN_DIM), jnp.float32)
    out3 = dagmm_vqvae_forward(x3, params)               # pads 250 -> 256
    jax.block_until_ready(out3)
    ref3 = _reference_forward(x3, params)
    for v in jax.tree_util.tree_leaves(out3):
        assert bool(jnp.all(jnp.isfinite(v)))
    assert out3["x_hat"].shape == (B3, IN_DIM)
    assert bool(jnp.allclose(out3["z_e"], ref3["z_e"], atol=2e-3, rtol=2e-3))
    assert _row_match_fraction(out3["gamma"], ref3["gamma"], 1e-2, 1e-2) >= 0.99
    assert bool(jnp.allclose(jnp.sum(out3["gamma"], axis=1), 1.0, atol=1e-3))

    print("KERNEL_OK")
</pallas_src>

<mosaic_0001>
module attributes {stable_mosaic.version = 11 : i64} {
  func.func @dagmm_vqvae_kernel(%arg0: i32, %arg1: memref<8x118xf32, #tpu.memory_space<vmem>>, %arg2: memref<118x60xf32, #tpu.memory_space<vmem>>, %arg3: memref<1x60xf32, #tpu.memory_space<vmem>>, %arg4: memref<60x30xf32, #tpu.memory_space<vmem>>, %arg5: memref<1x30xf32, #tpu.memory_space<vmem>>, %arg6: memref<30x10xf32, #tpu.memory_space<vmem>>, %arg7: memref<1x10xf32, #tpu.memory_space<vmem>>, %arg8: memref<10x1xf32, #tpu.memory_space<vmem>>, %arg9: memref<1x1xf32, #tpu.memory_space<vmem>>, %arg10: memref<1x16xf32, #tpu.memory_space<vmem>>, %arg11: memref<16x118xf32, #tpu.memory_space<vmem>>, %arg12: memref<3x10xf32, #tpu.memory_space<vmem>>, %arg13: memref<1x10xf32, #tpu.memory_space<vmem>>, %arg14: memref<10x2xf32, #tpu.memory_space<vmem>>, %arg15: memref<1x2xf32, #tpu.memory_space<vmem>>, %arg16: memref<8x128xf32, #tpu.memory_space<vmem>>) attributes {dimension_semantics = [#tpu.dimension_semantics<parallel>], iteration_bounds = array<i64: 1>, scalar_prefetch = 0 : i64, scratch_operands = 0 : i64, tpu.core_type = #tpu.core_type<tc>, window_params = [{transform_indices = @transform_0, window_bounds = array<i64: 8, 118>}, {pipeline_mode = #tpu.pipeline_mode<synchronous>, transform_indices = @transform_1, window_bounds = array<i64: 118, 60>}, {pipeline_mode = #tpu.pipeline_mode<synchronous>, transform_indices = @transform_2, window_bounds = array<i64: 1, 60>}, {pipeline_mode = #tpu.pipeline_mode<synchronous>, transform_indices = @transform_3, window_bounds = array<i64: 60, 30>}, {pipeline_mode = #tpu.pipeline_mode<synchronous>, transform_indices = @transform_4, window_bounds = array<i64: 1, 30>}, {pipeline_mode = #tpu.pipeline_mode<synchronous>, transform_indices = @transform_5, window_bounds = array<i64: 30, 10>}, {pipeline_mode = #tpu.pipeline_mode<synchronous>, transform_indices = @transform_6, window_bounds = array<i64: 1, 10>}, {pipeline_mode = #tpu.pipeline_mode<synchronous>, transform_indices = @transform_7, window_bounds = array<i64: 10, 1>}, {pipeline_mode = #tpu.pipeline_mode<synchronous>, transform_indices = @transform_8, window_bounds = array<i64: 1, 1>}, {pipeline_mode = #tpu.pipeline_mode<synchronous>, transform_indices = @transform_9, window_bounds = array<i64: 1, 16>}, {pipeline_mode = #tpu.pipeline_mode<synchronous>, transform_indices = @transform_10, window_bounds = array<i64: 16, 118>}, {pipeline_mode = #tpu.pipeline_mode<synchronous>, transform_indices = @transform_11, window_bounds = array<i64: 3, 10>}, {pipeline_mode = #tpu.pipeline_mode<synchronous>, transform_indices = @transform_12, window_bounds = array<i64: 1, 10>}, {pipeline_mode = #tpu.pipeline_mode<synchronous>, transform_indices = @transform_13, window_bounds = array<i64: 10, 2>}, {pipeline_mode = #tpu.pipeline_mode<synchronous>, transform_indices = @transform_14, window_bounds = array<i64: 1, 2>}, {transform_indices = @transform_15, window_bounds = array<i64: 8, 128>}]} {
    %c0 = arith.constant 0 : index
    %c0_0 = arith.constant 0 : index
    %0 = vector.load %arg1[%c0, %c0_0] : memref<8x118xf32, #tpu.memory_space<vmem>>, vector<8x118xf32>
    %c0_1 = arith.constant 0 : index
    %c0_2 = arith.constant 0 : index
    %1 = vector.load %arg2[%c0_1, %c0_2] : memref<118x60xf32, #tpu.memory_space<vmem>>, vector<118x60xf32>
    %cst = arith.constant dense<0.000000e+00> : vector<8x60xf32>
    %2 = tpu.matmul %0, %1, %cst {dimension_numbers = #tpu.dot_dimension_numbers<[1], [0], [0], [1], [0, 0, 1, 1], [], []>} : vector<8x118xf32>, vector<118x60xf32>, vector<8x60xf32> -> vector<8x60xf32>
    %c0_3 = arith.constant 0 : index
    %c0_4 = arith.constant 0 : index
    %3 = vector.load %arg3[%c0_3, %c0_4] : memref<1x60xf32, #tpu.memory_space<vmem>>, vector<1x60xf32>
    %4 = vector.broadcast %3 : vector<1x60xf32> to vector<8x60xf32>
    %5 = arith.addf %2, %4 : vector<8x60xf32>
    %6 = math.tanh %5 : vector<8x60xf32>
    %c0_5 = arith.constant 0 : index
    %c0_6 = arith.constant 0 : index
    %7 = vector.load %arg4[%c0_5, %c0_6] : memref<60x30xf32, #tpu.memory_space<vmem>>, vector<60x30xf32>
    %cst_7 = arith.constant dense<0.000000e+00> : vector<8x30xf32>
    %8 = tpu.matmul %6, %7, %cst_7 {dimension_numbers = #tpu.dot_dimension_numbers<[1], [0], [0], [1], [0, 0, 1, 1], [], []>} : vector<8x60xf32>, vector<60x30xf32>, vector<8x30xf32> -> vector<8x30xf32>
    %c0_8 = arith.constant 0 : index
    %c0_9 = arith.constant 0 : index
    %9 = vector.load %arg5[%c0_8, %c0_9] : memref<1x30xf32, #tpu.memory_space<vmem>>, vector<1x30xf32>
    %10 = vector.broadcast %9 : vector<1x30xf32> to vector<8x30xf32>
    %11 = arith.addf %8, %10 : vector<8x30xf32>
    %12 = math.tanh %11 : vector<8x30xf32>
    %c0_10 = arith.constant 0 : index
    %c0_11 = arith.constant 0 : index
    %13 = vector.load %arg6[%c0_10, %c0_11] : memref<30x10xf32, #tpu.memory_space<vmem>>, vector<30x10xf32>
    %cst_12 = arith.constant dense<0.000000e+00> : vector<8x10xf32>
    %14 = tpu.matmul %12, %13, %cst_12 {dimension_numbers = #tpu.dot_dimension_numbers<[1], [0], [0], [1], [0, 0, 1, 1], [], []>} : vector<8x30xf32>, vector<30x10xf32>, vector<8x10xf32> -> vector<8x10xf32>
    %c0_13 = arith.constant 0 : index
    %c0_14 = arith.constant 0 : index
    %15 = vector.load %arg7[%c0_13, %c0_14] : memref<1x10xf32, #tpu.memory_space<vmem>>, vector<1x10xf32>
    %16 = vector.broadcast %15 : vector<1x10xf32> to vector<8x10xf32>
    %17 = arith.addf %14, %16 : vector<8x10xf32>
    %18 = math.tanh %17 : vector<8x10xf32>
    %c0_15 = arith.constant 0 : index
    %c0_16 = arith.constant 0 : index
    %19 = vector.load %arg8[%c0_15, %c0_16] : memref<10x1xf32, #tpu.memory_space<vmem>>, vector<10x1xf32>
    %cst_17 = arith.constant dense<0.000000e+00> : vector<8x1xf32>
    %20 = tpu.matmul %18, %19, %cst_17 {dimension_numbers = #tpu.dot_dimension_numbers<[1], [0], [0], [1], [0, 0, 1, 1], [], []>} : vector<8x10xf32>, vector<10x1xf32>, vector<8x1xf32> -> vector<8x1xf32>
    %c0_18 = arith.constant 0 : index
    %c0_19 = arith.constant 0 : index
    %21 = vector.load %arg9[%c0_18, %c0_19] : memref<1x1xf32, #tpu.memory_space<vmem>>, vector<1x1xf32>
    %22 = vector.broadcast %21 : vector<1x1xf32> to vector<8x1xf32>
    %23 = arith.addf %20, %22 : vector<8x1xf32>
    %c0_20 = arith.constant 0 : index
    %c0_21 = arith.constant 0 : index
    %24 = vector.load %arg10[%c0_20, %c0_21] : memref<1x16xf32, #tpu.memory_space<vmem>>, vector<1x16xf32>
    %25 = vector.broadcast %23 : vector<8x1xf32> to vector<8x16xf32>
    %26 = vector.broadcast %24 : vector<1x16xf32> to vector<8x16xf32>
    %27 = arith.subf %25, %26 : vector<8x16xf32>
    %28 = arith.mulf %27, %27 : vector<8x16xf32>
    %29 = tpu.iota {dimensions = array<i32: 1>} : vector<8x16xi32>
    %cst_22 = arith.constant dense<0x7F800000> : vector<8xf32>
    %30 = vector.multi_reduction <minimumf>, %28, %cst_22 [1] : vector<8x16xf32> to vector<8xf32>
    %31 = vector.shape_cast %30 : vector<8xf32> to vector<8x1xf32>
    %32 = vector.broadcast %31 : vector<8x1xf32> to vector<8x16xf32>
    %33 = arith.cmpf ole, %28, %32 : vector<8x16xf32>
    %c16_i32 = arith.constant 16 : i32
    %34 = vector.broadcast %c16_i32 : i32 to vector<8x16xi32>
    %35 = arith.select %33, %29, %34 : vector<8x16xi1>, vector<8x16xi32>
    %cst_23 = arith.constant dense<2147483647> : vector<8xi32>
    %36 = vector.multi_reduction <minsi>, %35, %cst_23 [1] : vector<8x16xi32> to vector<8xi32>
    %37 = vector.shape_cast %36 : vector<8xi32> to vector<8x1xi32>
    %38 = vector.broadcast %37 : vector<8x1xi32> to vector<8x16xi32>
    %39 = arith.cmpi eq, %29, %38 : vector<8x16xi32>
    %40 = arith.extui %39 : vector<8x16xi1> to vector<8x16xi32>
    %41 = arith.sitofp %40 : vector<8x16xi32> to vector<8x16xf32>
    %42 = vector.broadcast %24 : vector<1x16xf32> to vector<8x16xf32>
    %43 = arith.mulf %41, %42 : vector<8x16xf32>
    %cst_24 = arith.constant dense<0.000000e+00> : vector<8xf32>
    %44 = vector.multi_reduction <add>, %43, %cst_24 [1] : vector<8x16xf32> to vector<8xf32>
    %45 = vector.shape_cast %44 : vector<8xf32> to vector<8x1xf32>
    %46 = arith.subf %45, %23 : vector<8x1xf32>
    %47 = arith.mulf %46, %46 : vector<8x1xf32>
    %c0_25 = arith.constant 0 : index
    %c0_26 = arith.constant 0 : index
    %48 = vector.load %arg11[%c0_25, %c0_26] : memref<16x118xf32, #tpu.memory_space<vmem>>, vector<16x118xf32>
    %cst_27 = arith.constant dense<0.000000e+00> : vector<8x118xf32>
    %49 = tpu.matmul %41, %48, %cst_27 {dimension_numbers = #tpu.dot_dimension_numbers<[1], [0], [0], [1], [0, 0, 1, 1], [], []>} : vector<8x16xf32>, vector<16x118xf32>, vector<8x118xf32> -> vector<8x118xf32>
    %50 = arith.mulf %0, %0 : vector<8x118xf32>
    %cst_28 = arith.constant dense<0.000000e+00> : vector<8xf32>
    %51 = vector.multi_reduction <add>, %50, %cst_28 [1] : vector<8x118xf32> to vector<8xf32>
    %52 = vector.shape_cast %51 : vector<8xf32> to vector<8x1xf32>
    %53 = arith.mulf %49, %49 : vector<8x118xf32>
    %cst_29 = arith.constant dense<0.000000e+00> : vector<8xf32>
    %54 = vector.multi_reduction <add>, %53, %cst_29 [1] : vector<8x118xf32> to vector<8xf32>
    %55 = vector.shape_cast %54 : vector<8xf32> to vector<8x1xf32>
    %56 = arith.mulf %0, %49 : vector<8x118xf32>
    %cst_30 = arith.constant dense<0.000000e+00> : vector<8xf32>
    %57 = vector.multi_reduction <add>, %56, %cst_30 [1] : vector<8x118xf32> to vector<8xf32>
    %58 = vector.shape_cast %57 : vector<8xf32> to vector<8x1xf32>
    %59 = arith.addf %52, %55 : vector<8x1xf32>
    %cst_31 = arith.constant 2.000000e+00 : f32
    %60 = vector.broadcast %cst_31 : f32 to vector<8x1xf32>
    %61 = arith.mulf %60, %58 : vector<8x1xf32>
    %62 = arith.subf %59, %61 : vector<8x1xf32>
    %cst_32 = arith.constant 0.000000e+00 : f32
    %63 = vector.broadcast %cst_32 : f32 to vector<8x1xf32>
    %64 = arith.maximumf %62, %63 : vector<8x1xf32>
    %65 = math.sqrt %64 : vector<8x1xf32>
    %66 = math.sqrt %52 : vector<8x1xf32>
    %cst_33 = arith.constant 9.99999996E-13 : f32
    %67 = vector.broadcast %cst_33 : f32 to vector<8x1xf32>
    %68 = arith.addf %66, %67 : vector<8x1xf32>
    %69 = tpu.reciprocal %68 {approx = true} : vector<8x1xf32> -> vector<8x1xf32>
    %70 = arith.mulf %65, %69 : vector<8x1xf32>
    %cst_34 = arith.constant 1.000000e-16 : f32
    %71 = vector.broadcast %cst_34 : f32 to vector<8x1xf32>
    %72 = arith.maximumf %52, %71 : vector<8x1xf32>
    %73 = math.rsqrt %72 : vector<8x1xf32>
    %cst_35 = arith.constant 1.000000e-16 : f32
    %74 = vector.broadcast %cst_35 : f32 to vector<8x1xf32>
    %75 = arith.maximumf %55, %74 : vector<8x1xf32>
    %76 = math.rsqrt %75 : vector<8x1xf32>
    %77 = arith.mulf %58, %73 : vector<8x1xf32>
    %78 = arith.mulf %77, %76 : vector<8x1xf32>
    %c0_36 = arith.constant 0 : index
    %c0_37 = arith.constant 0 : index
    %79 = vector.load %arg12[%c0_36, %c0_37] : memref<3x10xf32, #tpu.memory_space<vmem>>, vector<3x10xf32>
    %80 = vector.extract_strided_slice %79 {offsets = [0, 0], sizes = [1, 10], strides = [1, 1]} : vector<3x10xf32> to vector<1x10xf32>
    %81 = vector.broadcast %45 : vector<8x1xf32> to vector<8x10xf32>
    %82 = vector.broadcast %80 : vector<1x10xf32> to vector<8x10xf32>
    %83 = arith.mulf %81, %82 : vector<8x10xf32>
    %84 = vector.extract_strided_slice %79 {offsets = [1, 0], sizes = [1, 10], strides = [1, 1]} : vector<3x10xf32> to vector<1x10xf32>
    %85 = vector.broadcast %70 : vector<8x1xf32> to vector<8x10xf32>
    %86 = vector.broadcast %84 : vector<1x10xf32> to vector<8x10xf32>
    %87 = arith.mulf %85, %86 : vector<8x10xf32>
    %88 = arith.addf %83, %87 : vector<8x10xf32>
    %89 = vector.extract_strided_slice %79 {offsets = [2, 0], sizes = [1, 10], strides = [1, 1]} : vector<3x10xf32> to vector<1x10xf32>
    %90 = vector.broadcast %78 : vector<8x1xf32> to vector<8x10xf32>
    %91 = vector.broadcast %89 : vector<1x10xf32> to vector<8x10xf32>
    %92 = arith.mulf %90, %91 : vector<8x10xf32>
    %93 = arith.addf %88, %92 : vector<8x10xf32>
    %c0_38 = arith.constant 0 : index
    %c0_39 = arith.constant 0 : index
    %94 = vector.load %arg13[%c0_38, %c0_39] : memref<1x10xf32, #tpu.memory_space<vmem>>, vector<1x10xf32>
    %95 = vector.broadcast %94 : vector<1x10xf32> to vector<8x10xf32>
    %96 = arith.addf %93, %95 : vector<8x10xf32>
    %97 = math.tanh %96 : vector<8x10xf32>
    %c0_40 = arith.constant 0 : index
    %c0_41 = arith.constant 0 : index
    %98 = vector.load %arg14[%c0_40, %c0_41] : memref<10x2xf32, #tpu.memory_space<vmem>>, vector<10x2xf32>
    %cst_42 = arith.constant dense<0.000000e+00> : vector<8x2xf32>
    %99 = tpu.matmul %97, %98, %cst_42 {dimension_numbers = #tpu.dot_dimension_numbers<[1], [0], [0], [1], [0, 0, 1, 1], [], []>} : vector<8x10xf32>, vector<10x2xf32>, vector<8x2xf32> -> vector<8x2xf32>
    %c0_43 = arith.constant 0 : index
    %c0_44 = arith.constant 0 : index
    %100 = vector.load %arg15[%c0_43, %c0_44] : memref<1x2xf32, #tpu.memory_space<vmem>>, vector<1x2xf32>
    %101 = vector.broadcast %100 : vector<1x2xf32> to vector<8x2xf32>
    %102 = arith.addf %99, %101 : vector<8x2xf32>
    %cst_45 = arith.constant dense<0xFF800000> : vector<8xf32>
    %103 = vector.multi_reduction <maximumf>, %102, %cst_45 [1] : vector<8x2xf32> to vector<8xf32>
    %104 = vector.shape_cast %103 : vector<8xf32> to vector<8x1xf32>
    %105 = vector.broadcast %104 : vector<8x1xf32> to vector<8x2xf32>
    %106 = arith.subf %102, %105 : vector<8x2xf32>
    %107 = math.exp %106 : vector<8x2xf32>
    %cst_46 = arith.constant dense<0.000000e+00> : vector<8xf32>
    %108 = vector.multi_reduction <add>, %107, %cst_46 [1] : vector<8x2xf32> to vector<8xf32>
    %109 = vector.shape_cast %108 : vector<8xf32> to vector<8x1xf32>
    %110 = vector.broadcast %109 : vector<8x1xf32> to vector<8x2xf32>
    %111 = arith.divf %107, %110 : vector<8x2xf32>
    %cst_47 = arith.constant 0.000000e+00 : f32
    %112 = vector.broadcast %cst_47 : f32 to vector<8x3xf32>
    %113 = tpu.concatenate %49, %23, %45, %70, %78, %111, %47, %112 in 1 : vector<8x118xf32>, vector<8x1xf32>, vector<8x1xf32>, vector<8x1xf32>, vector<8x1xf32>, vector<8x2xf32>, vector<8x1xf32>, vector<8x3xf32> -> vector<8x128xf32>
    %c0_48 = arith.constant 0 : index
    %c0_49 = arith.constant 0 : index
    %114 = vector.load %arg16[%c0_48, %c0_49] : memref<8x128xf32, #tpu.memory_space<vmem>>, vector<8x128xf32>
    tpu.vector_store %arg16[%c0_48, %c0_49], %113 {strides = array<i32>} : memref<8x128xf32, #tpu.memory_space<vmem>>, vector<8x128xf32>,
    return
  }
  func.func @transform_0(%arg0: i32) -> (i32, i32) {
    %c0_i32 = arith.constant 0 : i32
    %c0_i32_0 = arith.constant 0 : i32
    return %arg0, %c0_i32 : i32, i32
  }
  func.func @transform_1(%arg0: i32) -> (i32, i32) {
    %c0_i32 = arith.constant 0 : i32
    %c0_i32_0 = arith.constant 0 : i32
    %c0_i32_1 = arith.constant 0 : i32
    return %c0_i32, %c0_i32_0 : i32, i32
  }
  func.func @transform_2(%arg0: i32) -> (i32, i32) {
    %c0_i32 = arith.constant 0 : i32
    %c0_i32_0 = arith.constant 0 : i32
    %c0_i32_1 = arith.constant 0 : i32
    return %c0_i32, %c0_i32_0 : i32, i32
  }
  func.func @transform_3(%arg0: i32) -> (i32, i32) {
    %c0_i32 = arith.constant 0 : i32
    %c0_i32_0 = arith.constant 0 : i32
    %c0_i32_1 = arith.constant 0 : i32
    return %c0_i32, %c0_i32_0 : i32, i32
  }
  func.func @transform_4(%arg0: i32) -> (i32, i32) {
    %c0_i32 = arith.constant 0 : i32
    %c0_i32_0 = arith.constant 0 : i32
    %c0_i32_1 = arith.constant 0 : i32
    return %c0_i32, %c0_i32_0 : i32, i32
  }
  func.func @transform_5(%arg0: i32) -> (i32, i32) {
    %c0_i32 = arith.constant 0 : i32
    %c0_i32_0 = arith.constant 0 : i32
    %c0_i32_1 = arith.constant 0 : i32
    return %c0_i32, %c0_i32_0 : i32, i32
  }
  func.func @transform_6(%arg0: i32) -> (i32, i32) {
    %c0_i32 = arith.constant 0 : i32
    %c0_i32_0 = arith.constant 0 : i32
    %c0_i32_1 = arith.constant 0 : i32
    return %c0_i32, %c0_i32_0 : i32, i32
  }
  func.func @transform_7(%arg0: i32) -> (i32, i32) {
    %c0_i32 = arith.constant 0 : i32
    %c0_i32_0 = arith.constant 0 : i32
    %c0_i32_1 = arith.constant 0 : i32
    return %c0_i32, %c0_i32_0 : i32, i32
  }
  func.func @transform_8(%arg0: i32) -> (i32, i32) {
    %c0_i32 = arith.constant 0 : i32
    %c0_i32_0 = arith.constant 0 : i32
    %c0_i32_1 = arith.constant 0 : i32
    return %c0_i32, %c0_i32_0 : i32, i32
  }
  func.func @transform_9(%arg0: i32) -> (i32, i32) {
    %c0_i32 = arith.constant 0 : i32
    %c0_i32_0 = arith.constant 0 : i32
    %c0_i32_1 = arith.constant 0 : i32
    return %c0_i32, %c0_i32_0 : i32, i32
  }
  func.func @transform_10(%arg0: i32) -> (i32, i32) {
    %c0_i32 = arith.constant 0 : i32
    %c0_i32_0 = arith.constant 0 : i32
    %c0_i32_1 = arith.constant 0 : i32
    return %c0_i32, %c0_i32_0 : i32, i32
  }
  func.func @transform_11(%arg0: i32) -> (i32, i32) {
    %c0_i32 = arith.constant 0 : i32
    %c0_i32_0 = arith.constant 0 : i32
    %c0_i32_1 = arith.constant 0 : i32
    return %c0_i32, %c0_i32_0 : i32, i32
  }
  func.func @transform_12(%arg0: i32) -> (i32, i32) {
    %c0_i32 = arith.constant 0 : i32
    %c0_i32_0 = arith.constant 0 : i32
    %c0_i32_1 = arith.constant 0 : i32
    return %c0_i32, %c0_i32_0 : i32, i32
  }
  func.func @transform_13(%arg0: i32) -> (i32, i32) {
    %c0_i32 = arith.constant 0 : i32
    %c0_i32_0 = arith.constant 0 : i32
    %c0_i32_1 = arith.constant 0 : i32
    return %c0_i32, %c0_i32_0 : i32, i32
  }
  func.func @transform_14(%arg0: i32) -> (i32, i32) {
    %c0_i32 = arith.constant 0 : i32
    %c0_i32_0 = arith.constant 0 : i32
    %c0_i32_1 = arith.constant 0 : i32
    return %c0_i32, %c0_i32_0 : i32, i32
  }
  func.func @transform_15(%arg0: i32) -> (i32, i32) {
    %c0_i32 = arith.constant 0 : i32
    %c0_i32_0 = arith.constant 0 : i32
    return %arg0, %c0_i32 : i32, i32
  }
}

</mosaic_0001>

<llo_original>
// kernel: dagmm_vqvae_forward.1
$region0: #{dagmm_vqvae_forward.1}
  #allocation0 [shape = 'u32[]', space=smem, size = 0x4, offset = 0x4, fixed_abs, tag = 'smem constant byte address 0x4 - core index']
  #allocation1 [shape = 'u32[144,128]{1,0:T(1,128)}', space=vmem, size = 0x12000, scoped, tag = 'internal scratch']
  #allocation2 [shape = 'f32[1,1]{1,0:T(1,128)S(1)}', space=vmem, size = 0x200, scoped, tag = 'scoped memory for dagmm_vqvae_forward.1']
  %s0 = inlined_call_operand.vmem [shape: f32[8,118], index: 0, kind: input, shape index: {}]
  %s1 = inlined_call_operand.vmem [shape: f32[118,60], index: 1, kind: input, shape index: {}]
  %s2 = inlined_call_operand.vmem [shape: f32[1,60], index: 2, kind: input, shape index: {}]
  %s3 = inlined_call_operand.vmem [shape: f32[60,30], index: 3, kind: input, shape index: {}]
  %s4 = inlined_call_operand.vmem [shape: f32[1,30], index: 4, kind: input, shape index: {}]
  %s5 = inlined_call_operand.vmem [shape: f32[30,10], index: 5, kind: input, shape index: {}]
  %s6 = inlined_call_operand.vmem [shape: f32[1,10], index: 6, kind: input, shape index: {}]
  %s7 = inlined_call_operand.vmem [shape: f32[10,1], index: 7, kind: input, shape index: {}]
  %s8 = inlined_call_operand.<no memory space> [shape: f32[1,1], index: 8, kind: input, shape index: {}]
  %s9 = inlined_call_operand.vmem [shape: f32[1,16], index: 9, kind: input, shape index: {}]
  %s10 = inlined_call_operand.vmem [shape: f32[16,118], index: 10, kind: input, shape index: {}]
  %s11 = inlined_call_operand.vmem [shape: f32[3,10], index: 11, kind: input, shape index: {}]
  %s12 = inlined_call_operand.vmem [shape: f32[1,10], index: 12, kind: input, shape index: {}]
  %s13 = inlined_call_operand.vmem [shape: f32[10,2], index: 13, kind: input, shape index: {}]
  %s14 = inlined_call_operand.vmem [shape: f32[1,2], index: 14, kind: input, shape index: {}]
  %s15 = inlined_call_operand.vmem [shape: f32[8,128], index: 15, kind: output, shape index: {}]
  %s16 = sld [smem:[#allocation0]]
  $region70: #{dagmm_vqvae_forward.1} parent=0
    _
  %s18 = ssub.s32 1, %s16
  %s19 = scalar_select 0, %s18, %s16
  %v20 = vstv %s8
  %21 = vst [vmem:[#allocation2] sm:$0x1] %v20
  // Predicated region
  $region2: #{dagmm_vqvae_forward.1} parent=0 // pred_check
    _
  $region3: #{dagmm_vqvae_forward.1} parent=0 // pred_check_branch
    %23 = sbr.rel (0) target = $region5
  $region4: #{dagmm_vqvae_forward.1} parent=0 // pred_region
    _
  $region5: #{dagmm_vqvae_forward.1} parent=0 // pred_fallthru
    _
  // Predicated region
  $region6: #{dagmm_vqvae_forward.1} parent=0 // pred_check
    _
  $region7: #{dagmm_vqvae_forward.1} parent=0 // pred_check_branch
    %25 = sbr.rel (0) target = $region9
  $region8: #{dagmm_vqvae_forward.1} parent=0 // pred_region
    _
  $region9: #{dagmm_vqvae_forward.1} parent=0 // pred_fallthru
    _
  // Predicated region
  $region10: #{dagmm_vqvae_forward.1} parent=0 // pred_check
    _
  $region11: #{dagmm_vqvae_forward.1} parent=0 // pred_check_branch
    %27 = sbr.rel (0) target = $region13
  $region12: #{dagmm_vqvae_forward.1} parent=0 // pred_region
    _
  $region13: #{dagmm_vqvae_forward.1} parent=0 // pred_fallthru
    _
  // Predicated region
  $region14: #{dagmm_vqvae_forward.1} parent=0 // pred_check
    _
  $region15: #{dagmm_vqvae_forward.1} parent=0 // pred_check_branch
    %29 = sbr.rel (0) target = $region17
  $region16: #{dagmm_vqvae_forward.1} parent=0 // pred_region
    _
  $region17: #{dagmm_vqvae_forward.1} parent=0 // pred_fallthru
    _
  // Predicated region
  $region18: #{dagmm_vqvae_forward.1} parent=0 // pred_check
    _
  $region19: #{dagmm_vqvae_forward.1} parent=0 // pred_check_branch
    %31 = sbr.rel (0) target = $region21
  $region20: #{dagmm_vqvae_forward.1} parent=0 // pred_region
    _
  $region21: #{dagmm_vqvae_forward.1} parent=0 // pred_fallthru
    _
  // Predicated region
  $region22: #{dagmm_vqvae_forward.1} parent=0 // pred_check
    _
  $region23: #{dagmm_vqvae_forward.1} parent=0 // pred_check_branch
    %33 = sbr.rel (0) target = $region25
  $region24: #{dagmm_vqvae_forward.1} parent=0 // pred_region
    _
  $region25: #{dagmm_vqvae_forward.1} parent=0 // pred_fallthru
    _
  // Predicated region
  $region26: #{dagmm_vqvae_forward.1} parent=0 // pred_check
    _
  $region27: #{dagmm_vqvae_forward.1} parent=0 // pred_check_branch
    %35 = sbr.rel (0) target = $region29
  $region28: #{dagmm_vqvae_forward.1} parent=0 // pred_region
    _
  $region29: #{dagmm_vqvae_forward.1} parent=0 // pred_fallthru
    _
  // Predicated region
  $region30: #{dagmm_vqvae_forward.1} parent=0 // pred_check
    _
  $region31: #{dagmm_vqvae_forward.1} parent=0 // pred_check_branch
    %37 = sbr.rel (0) target = $region33
  $region32: #{dagmm_vqvae_forward.1} parent=0 // pred_region
    _
  $region33: #{dagmm_vqvae_forward.1} parent=0 // pred_fallthru
    _
  // Predicated region
  $region34: #{dagmm_vqvae_forward.1} parent=0 // pred_check
    _
  $region35: #{dagmm_vqvae_forward.1} parent=0 // pred_check_branch
    %39 = sbr.rel (0) target = $region37
  $region36: #{dagmm_vqvae_forward.1} parent=0 // pred_region
    _
  $region37: #{dagmm_vqvae_forward.1} parent=0 // pred_fallthru
    _
  // Predicated region
  $region38: #{dagmm_vqvae_forward.1} parent=0 // pred_check
    _
  $region39: #{dagmm_vqvae_forward.1} parent=0 // pred_check_branch
    %41 = sbr.rel (0) target = $region41
  $region40: #{dagmm_vqvae_forward.1} parent=0 // pred_region
    _
  $region41: #{dagmm_vqvae_forward.1} parent=0 // pred_fallthru
    _
  // Predicated region
  $region42: #{dagmm_vqvae_forward.1} parent=0 // pred_check
    _
  $region43: #{dagmm_vqvae_forward.1} parent=0 // pred_check_branch
    %43 = sbr.rel (0) target = $region45
  $region44: #{dagmm_vqvae_forward.1} parent=0 // pred_region
    _
  $region45: #{dagmm_vqvae_forward.1} parent=0 // pred_fallthru
    _
  // Predicated region
  $region46: #{dagmm_vqvae_forward.1} parent=0 // pred_check
    _
  $region47: #{dagmm_vqvae_forward.1} parent=0 // pred_check_branch
    %45 = sbr.rel (0) target = $region49
  $region48: #{dagmm_vqvae_forward.1} parent=0 // pred_region
    _
  $region49: #{dagmm_vqvae_forward.1} parent=0 // pred_fallthru
    _
  // Predicated region
  $region50: #{dagmm_vqvae_forward.1} parent=0 // pred_check
    _
  $region51: #{dagmm_vqvae_forward.1} parent=0 // pred_check_branch
    %47 = sbr.rel (0) target = $region53
  $region52: #{dagmm_vqvae_forward.1} parent=0 // pred_region
    _
  $region53: #{dagmm_vqvae_forward.1} parent=0 // pred_fallthru
    _
  // Predicated region
  $region54: #{dagmm_vqvae_forward.1} parent=0 // pred_check
    _
  $region55: #{dagmm_vqvae_forward.1} parent=0 // pred_check_branch
    %49 = sbr.rel (0) target = $region57
  $region56: #{dagmm_vqvae_forward.1} parent=0 // pred_region
    _
  $region57: #{dagmm_vqvae_forward.1} parent=0 // pred_fallthru
    _
  // Predicated region
  $region58: #{dagmm_vqvae_forward.1} parent=0 // pred_check
    _
  $region59: #{dagmm_vqvae_forward.1} parent=0 // pred_check_branch
    %51 = sbr.rel (0) target = $region61
  $region60: #{dagmm_vqvae_forward.1} parent=0 // pred_region
    _
  $region61: #{dagmm_vqvae_forward.1} parent=0 // pred_fallthru
    _
  %v52 = vld [vmem:[%s0] sm:$0xff]
  %v53 = vld [vmem:[%s1] sm:$0xff]
  %v54 = vld [vmem:[%s1 + $0x8] sm:$0xff]
  %v55 = vld [vmem:[%s1 + $0x10] sm:$0xff]
  %v56 = vld [vmem:[%s1 + $0x18] sm:$0xff]
  %v57 = vld [vmem:[%s1 + $0x20] sm:$0xff]
  %v58 = vld [vmem:[%s1 + $0x28] sm:$0xff]
  %v59 = vld [vmem:[%s1 + $0x30] sm:$0xff]
  %v60 = vld [vmem:[%s1 + $0x38] sm:$0xff]
  %v61 = vld [vmem:[%s1 + $0x40] sm:$0xff]
  %v62 = vld [vmem:[%s1 + $0x48] sm:$0xff]
  %v63 = vld [vmem:[%s1 + $0x50] sm:$0xff]
  %v64 = vld [vmem:[%s1 + $0x58] sm:$0xff]
  %v65 = vld [vmem:[%s1 + $0x60] sm:$0xff]
  %v66 = vld [vmem:[%s1 + $0x68] sm:$0xff]
  %v67 = vld [vmem:[%s1 + $0x70] sm:$0x3f]
  %v68 = vld [vmem:[%s2] sm:$0x1]
  %v70 = vlaneseq
  %v71 = vshrl.u32 %v70, 7
  %v72 = vsub.s32 0, %v71
  %v73 = vrot.slane %v68, %v72
  %vm75 = vcmask 965632
  %v77 = vsel %vm75, %v52, 0
  %vm79 = vcmask 1045504
  %v81 = vsel %vm79, %v67, 0
  %83 = vmatprep.subr.mxu0 0.0
  %84 = vmatpush1.msra.mxu0 0.0
  %85 = vmatprep.subr.mxu0 0.0
  %86 = vmatpush1.msra.mxu0 %v81
  %87 = vmatprep.subr.mxu0 0.0
  %88 = vmatpush1.msra.mxu0 %v66
  %89 = vmatprep.subr.mxu0 0.0
  %90 = vmatpush1.msra.mxu0 %v65
  %91 = vmatprep.subr.mxu0 0.0
  %92 = vmatpush1.msra.mxu0 %v64
  %93 = vmatprep.subr.mxu0 0.0
  %94 = vmatpush1.msra.mxu0 %v63
  %95 = vmatprep.subr.mxu0 0.0
  %96 = vmatpush1.msra.mxu0 %v62
  %97 = vmatprep.subr.mxu0 0.0
  %98 = vmatpush1.msra.mxu0 %v61
  %99 = vmatprep.subr.mxu0 0.0
  %100 = vmatpush1.msra.mxu0 %v60
  %101 = vmatprep.subr.mxu0 0.0
  %102 = vmatpush1.msra.mxu0 %v59
  %103 = vmatprep.subr.mxu0 0.0
  %104 = vmatpush1.msra.mxu0 %v58
  %105 = vmatprep.subr.mxu0 0.0
  %106 = vmatpush1.msra.mxu0 %v57
  %107 = vmatprep.subr.mxu0 0.0
  %108 = vmatpush1.msra.mxu0 %v56
  %109 = vmatprep.subr.mxu0 0.0
  %110 = vmatpush1.msra.mxu0 %v55
  %111 = vmatprep.subr.mxu0 0.0
  %112 = vmatpush1.msra.mxu0 %v54
  %113 = vmatprep.subr.mxu0 0.0
  %114 = vmatpush1.msra.mxu0 %v53
  %115 = vmatprep.subr.mxu0 0.0
  %116 = vmatpush2.msra.mxu0 0.0
  %117 = vmatprep.subr.mxu0 0.0
  %118 = vmatpush2.msra.mxu0 0.0
  %119 = vmatprep.subr.mxu0 0.0
  %120 = vmatpush2.msra.mxu0 0.0
  %121 = vmatprep.subr.mxu0 0.0
  %122 = vmatpush2.msra.mxu0 0.0
  %123 = vmatprep.subr.mxu0 0.0
  %124 = vmatpush2.msra.mxu0 0.0
  %125 = vmatprep.subr.mxu0 0.0
  %126 = vmatpush2.msra.mxu0 0.0
  %127 = vmatprep.subr.mxu0 0.0
  %128 = vmatpush2.msra.mxu0 0.0
  %129 = vmatprep.subr.mxu0 0.0
  %130 = vmatpush2.msra.mxu0 0.0
  %131 = vmatprep.subr.mxu0 0.0
  %132 = vmatpush2.msra.mxu0 0.0
  %133 = vmatprep.subr.mxu0 0.0
  %134 = vmatpush2.msra.mxu0 0.0
  %135 = vmatprep.subr.mxu0 0.0
  %136 = vmatpush2.msra.mxu0 0.0
  %137 = vmatprep.subr.mxu0 0.0
  %138 = vmatpush2.msra.mxu0 0.0
  %139 = vmatprep.subr.mxu0 0.0
  %140 = vmatpush2.msra.mxu0 0.0
  %141 = vmatprep.subr.mxu0 0.0
  %142 = vmatpush2.msra.mxu0 0.0
  %143 = vmatprep.subr.mxu0 0.0
  %144 = vmatpush2.msra.mxu0 0.0
  %145 = vmatprep.subr.mxu0 0.0
  %146 = vmatpush2.msra.mxu0 0.0
  %147 = vmatprep.mubr.f32.mxu0 0.0
  %148 = vmatmul.mubr.f32.gmra.mxu0 %v77
  %v149 = vpop.f32.mrf.mxu0
  %v150 = vadd.f32 %v73, %v149
  %v151 = vpop.f32.mrf.mxu0
  %152 = vdwg.mxu0
  %v153 = vtanh.pop %v150
  %v154 = vld [vmem:[%s3] sm:$0xff]
  %v155 = vld [vmem:[%s3 + $0x8] sm:$0xff]
  %v156 = vld [vmem:[%s3 + $0x10] sm:$0xff]
  %v157 = vld [vmem:[%s3 + $0x18] sm:$0xff]
  %v158 = vld [vmem:[%s3 + $0x20] sm:$0xff]
  %v159 = vld [vmem:[%s3 + $0x28] sm:$0xff]
  %v160 = vld [vmem:[%s3 + $0x30] sm:$0xff]
  %v161 = vld [vmem:[%s3 + $0x38] sm:$0xf]
  %v162 = vld [vmem:[%s4] sm:$0x1]
  %v164 = vlaneseq
  %v165 = vshrl.u32 %v164, 7
  %v166 = vsub.s32 0, %v165
  %v167 = vrot.slane %v162, %v166
  %vm169 = vcmask 490496
  %v171 = vsel %vm169, %v153, 0
  %vm173 = vcmask 1043456
  %v175 = vsel %vm173, %v161, 0
  %177 = vmatprep.subr.mxu0 0.0
  %178 = vmatpush1.msra.mxu0 0.0
  %179 = vmatprep.subr.mxu0 0.0
  %180 = vmatpush1.msra.mxu0 0.0
  %181 = vmatprep.subr.mxu0 0.0
  %182 = vmatpush1.msra.mxu0 0.0
  %183 = vmatprep.subr.mxu0 0.0
  %184 = vmatpush1.msra.mxu0 0.0
  %185 = vmatprep.subr.mxu0 0.0
  %186 = vmatpush1.msra.mxu0 0.0
  %187 = vmatprep.subr.mxu0 0.0
  %188 = vmatpush1.msra.mxu0 0.0
  %189 = vmatprep.subr.mxu0 0.0
  %190 = vmatpush1.msra.mxu0 0.0
  %191 = vmatprep.subr.mxu0 0.0
  %192 = vmatpush1.msra.mxu0 0.0
  %193 = vmatprep.subr.mxu0 0.0
  %194 = vmatpush1.msra.mxu0 %v175
  %195 = vmatprep.subr.mxu0 0.0
  %196 = vmatpush1.msra.mxu0 %v160
  %197 = vmatprep.subr.mxu0 0.0
  %198 = vmatpush1.msra.mxu0 %v159
  %199 = vmatprep.subr.mxu0 0.0
  %200 = vmatpush1.msra.mxu0 %v158
  %201 = vmatprep.subr.mxu0 0.0
  %202 = vmatpush1.msra.mxu0 %v157
  %203 = vmatprep.subr.mxu0 0.0
  %204 = vmatpush1.msra.mxu0 %v156
  %205 = vmatprep.subr.mxu0 0.0
  %206 = vmatpush1.msra.mxu0 %v155
  %207 = vmatprep.subr.mxu0 0.0
  %208 = vmatpush1.msra.mxu0 %v154
  %209 = vmatprep.subr.mxu0 0.0
  %210 = vmatpush2.msra.mxu0 0.0
  %211 = vmatprep.subr.mxu0 0.0
  %212 = vmatpush2.msra.mxu0 0.0
  %213 = vmatprep.subr.mxu0 0.0
  %214 = vmatpush2.msra.mxu0 0.0
  %215 = vmatprep.subr.mxu0 0.0
  %216 = vmatpush2.msra.mxu0 0.0
  %217 = vmatprep.subr.mxu0 0.0
  %218 = vmatpush2.msra.mxu0 0.0
  %219 = vmatprep.subr.mxu0 0.0
  %220 = vmatpush2.msra.mxu0 0.0
  %221 = vmatprep.subr.mxu0 0.0
  %222 = vmatpush2.msra.mxu0 0.0
  %223 = vmatprep.subr.mxu0 0.0
  %224 = vmatpush2.msra.mxu0 0.0
  %225 = vmatprep.subr.mxu0 0.0
  %226 = vmatpush2.msra.mxu0 0.0
  %227 = vmatprep.subr.mxu0 0.0
  %228 = vmatpush2.msra.mxu0 0.0
  %229 = vmatprep.subr.mxu0 0.0
  %230 = vmatpush2.msra.mxu0 0.0
  %231 = vmatprep.subr.mxu0 0.0
  %232 = vmatpush2.msra.mxu0 0.0
  %233 = vmatprep.subr.mxu0 0.0
  %234 = vmatpush2.msra.mxu0 0.0
  %235 = vmatprep.subr.mxu0 0.0
  %236 = vmatpush2.msra.mxu0 0.0
  %237 = vmatprep.subr.mxu0 0.0
  %238 = vmatpush2.msra.mxu0 0.0
  %239 = vmatprep.subr.mxu0 0.0
  %240 = vmatpush2.msra.mxu0 0.0
  %241 = vmatprep.mubr.f32.mxu0 0.0
  %242 = vmatmul.mubr.f32.gmra.mxu0 %v171
  %v243 = vpop.f32.mrf.mxu0
  %v244 = vadd.f32 %v167, %v243
  %v245 = vpop.f32.mrf.mxu0
  %246 = vdwg.mxu0
  %v247 = vtanh.pop %v244
  %v248 = vld [vmem:[%s5] sm:$0xff]
  %v249 = vld [vmem:[%s5 + $0x8] sm:$0xff]
  %v250 = vld [vmem:[%s5 + $0x10] sm:$0xff]
  %v251 = vld [vmem:[%s5 + $0x18] sm:$0x3f]
  %v252 = vld [vmem:[%s6] sm:$0x1]
  %v254 = vlaneseq
  %v255 = vshrl.u32 %v254, 7
  %v256 = vsub.s32 0, %v255
  %v257 = vrot.slane %v252, %v256
  %vm259 = vcmask 244736
  %v261 = vsel %vm259, %v247, 0
  %v264 = vsel %vm79, %v251, 0
  %266 = vmatprep.subr.mxu0 0.0
  %267 = vmatpush1.msra.mxu0 0.0
  %268 = vmatprep.subr.mxu0 0.0
  %269 = vmatpush1.msra.mxu0 0.0
  %270 = vmatprep.subr.mxu0 0.0
  %271 = vmatpush1.msra.mxu0 0.0
  %272 = vmatprep.subr.mxu0 0.0
  %273 = vmatpush1.msra.mxu0 0.0
  %274 = vmatprep.subr.mxu0 0.0
  %275 = vmatpush1.msra.mxu0 0.0
  %276 = vmatprep.subr.mxu0 0.0
  %277 = vmatpush1.msra.mxu0 0.0
  %278 = vmatprep.subr.mxu0 0.0
  %279 = vmatpush1.msra.mxu0 0.0
  %280 = vmatprep.subr.mxu0 0.0
  %281 = vmatpush1.msra.mxu0 0.0
  %282 = vmatprep.subr.mxu0 0.0
  %283 = vmatpush1.msra.mxu0 0.0
  %284 = vmatprep.subr.mxu0 0.0
  %285 = vmatpush1.msra.mxu0 0.0
  %286 = vmatprep.subr.mxu0 0.0
  %287 = vmatpush1.msra.mxu0 0.0
  %288 = vmatprep.subr.mxu0 0.0
  %289 = vmatpush1.msra.mxu0 0.0
  %290 = vmatprep.subr.mxu0 0.0
  %291 = vmatpush1.msra.mxu0 %v264
  %292 = vmatprep.subr.mxu0 0.0
  %293 = vmatpush1.msra.mxu0 %v250
  %294 = vmatprep.subr.mxu0 0.0
  %295 = vmatpush1.msra.mxu0 %v249
  %296 = vmatprep.subr.mxu0 0.0
  %297 = vmatpush1.msra.mxu0 %v248
  %298 = vmatprep.subr.mxu0 0.0
  %299 = vmatpush2.msra.mxu0 0.0
  %300 = vmatprep.subr.mxu0 0.0
  %301 = vmatpush2.msra.mxu0 0.0
  %302 = vmatprep.subr.mxu0 0.0
  %303 = vmatpush2.msra.mxu0 0.0
  %304 = vmatprep.subr.mxu0 0.0
  %305 = vmatpush2.msra.mxu0 0.0
  %306 = vmatprep.subr.mxu0 0.0
  %307 = vmatpush2.msra.mxu0 0.0
  %308 = vmatprep.subr.mxu0 0.0
  %309 = vmatpush2.msra.mxu0 0.0
  %310 = vmatprep.subr.mxu0 0.0
  %311 = vmatpush2.msra.mxu0 0.0
  %312 = vmatprep.subr.mxu0 0.0
  %313 = vmatpush2.msra.mxu0 0.0
  %314 = vmatprep.subr.mxu0 0.0
  %315 = vmatpush2.msra.mxu0 0.0
  %316 = vmatprep.subr.mxu0 0.0
  %317 = vmatpush2.msra.mxu0 0.0
  %318 = vmatprep.subr.mxu0 0.0
  %319 = vmatpush2.msra.mxu0 0.0
  %320 = vmatprep.subr.mxu0 0.0
  %321 = vmatpush2.msra.mxu0 0.0
  %322 = vmatprep.subr.mxu0 0.0
  %323 = vmatpush2.msra.mxu0 0.0
  %324 = vmatprep.subr.mxu0 0.0
  %325 = vmatpush2.msra.mxu0 0.0
  %326 = vmatprep.subr.mxu0 0.0
  %327 = vmatpush2.msra.mxu0 0.0
  %328 = vmatprep.subr.mxu0 0.0
  %329 = vmatpush2.msra.mxu0 0.0
  %330 = vmatprep.mubr.f32.mxu0 0.0
  %331 = vmatmul.mubr.f32.gmra.mxu0 %v261
  %v332 = vpop.f32.mrf.mxu0
  %v333 = vadd.f32 %v257, %v332
  %v334 = vpop.f32.mrf.mxu0
  %335 = vdwg.mxu0
  %v336 = vtanh.pop %v333
  %v337 = vld [vmem:[%s7] sm:$0xff]
  %v338 = vld [vmem:[%s7 + $0x8] sm:$0x3]
  %v339 = vld [vmem:[#allocation2] sm:$0x1]
  %v341 = vlaneseq
  %v342 = vshrl.u32 %v341, 7
  %v343 = vsub.s32 0, %v342
  %v344 = vrot.slane %v339, %v343
  %vm346 = vcmask 80896
  %v348 = vsel %vm346, %v336, 0
  %vm350 = vcmask 1041408
  %v352 = vsel %vm350, %v338, 0
  %354 = vmatprep.subr.mxu0 0.0
  %355 = vmatpush1.msra.mxu0 0.0
  %356 = vmatprep.subr.mxu0 0.0
  %357 = vmatpush1.msra.mxu0 0.0
  %358 = vmatprep.subr.mxu0 0.0
  %359 = vmatpush1.msra.mxu0 0.0
  %360 = vmatprep.subr.mxu0 0.0
  %361 = vmatpush1.msra.mxu0 0.0
  %362 = vmatprep.subr.mxu0 0.0
  %363 = vmatpush1.msra.mxu0 0.0
  %364 = vmatprep.subr.mxu0 0.0
  %365 = vmatpush1.msra.mxu0 0.0
  %366 = vmatprep.subr.mxu0 0.0
  %367 = vmatpush1.msra.mxu0 0.0
  %368 = vmatprep.subr.mxu0 0.0
  %369 = vmatpush1.msra.mxu0 0.0
  %370 = vmatprep.subr.mxu0 0.0
  %371 = vmatpush1.msra.mxu0 0.0
  %372 = vmatprep.subr.mxu0 0.0
  %373 = vmatpush1.msra.mxu0 0.0
  %374 = vmatprep.subr.mxu0 0.0
  %375 = vmatpush1.msra.mxu0 0.0
  %376 = vmatprep.subr.mxu0 0.0
  %377 = vmatpush1.msra.mxu0 0.0
  %378 = vmatprep.subr.mxu0 0.0
  %379 = vmatpush1.msra.mxu0 0.0
  %380 = vmatprep.subr.mxu0 0.0
  %381 = vmatpush1.msra.mxu0 0.0
  %382 = vmatprep.subr.mxu0 0.0
  %383 = vmatpush1.msra.mxu0 %v352
  %384 = vmatprep.subr.mxu0 0.0
  %385 = vmatpush1.msra.mxu0 %v337
  %386 = vmatprep.subr.mxu0 0.0
  %387 = vmatpush2.msra.mxu0 0.0
  %388 = vmatprep.subr.mxu0 0.0
  %389 = vmatpush2.msra.mxu0 0.0
  %390 = vmatprep.subr.mxu0 0.0
  %391 = vmatpush2.msra.mxu0 0.0
  %392 = vmatprep.subr.mxu0 0.0
  %393 = vmatpush2.msra.mxu0 0.0
  %394 = vmatprep.subr.mxu0 0.0
  %395 = vmatpush2.msra.mxu0 0.0
  %396 = vmatprep.subr.mxu0 0.0
  %397 = vmatpush2.msra.mxu0 0.0
  %398 = vmatprep.subr.mxu0 0.0
  %399 = vmatpush2.msra.mxu0 0.0
  %400 = vmatprep.subr.mxu0 0.0
  %401 = vmatpush2.msra.mxu0 0.0
  %402 = vmatprep.subr.mxu0 0.0
  %403 = vmatpush2.msra.mxu0 0.0
  %404 = vmatprep.subr.mxu0 0.0
  %405 = vmatpush2.msra.mxu0 0.0
  %406 = vmatprep.subr.mxu0 0.0
  %407 = vmatpush2.msra.mxu0 0.0
  %408 = vmatprep.subr.mxu0 0.0
  %409 = vmatpush2.msra.mxu0 0.0
  %410 = vmatprep.subr.mxu0 0.0
  %411 = vmatpush2.msra.mxu0 0.0
  %412 = vmatprep.subr.mxu0 0.0
  %413 = vmatpush2.msra.mxu0 0.0
  %414 = vmatprep.subr.mxu0 0.0
  %415 = vmatpush2.msra.mxu0 0.0
  %416 = vmatprep.subr.mxu0 0.0
  %417 = vmatpush2.msra.mxu0 0.0
  %418 = vmatprep.mubr.f32.mxu0 0.0
  %419 = vmatmul.mubr.f32.gmra.mxu0 %v348
  %v420 = vpop.f32.mrf.mxu0
  %v421 = vadd.f32 %v344, %v420
  %v422 = vpop.f32.mrf.mxu0
  %423 = vdwg.mxu0
  %v424 = vld [vmem:[%s9] sm:$0x1]
  %426 = vset.pattern.permute.xlu0 0
  %427 = vperm.xlu0 %426, %v421
  %v428 = vpop.permute.xlu0 %427
  %v431 = vlaneseq
  %v432 = vshrl.u32 %v431, 7
  %v433 = vsub.s32 0, %v432
  %v434 = vrot.slane %v424, %v433
  %v436 = vsub.f32 %v428, %v434
  %v437 = vmul.f32 %v436, %v436
  %v438 = vlaneseq
  %v439 = vand.u32 %v438, 127
  %vm440 = vcmask 130048
  %v441 = vsel %vm440, %v437, inf
  %442 = vmin.xlane.f32.xlu0 %v441
  %v443 = vpop.xlane.xlu0 %442
  %vm444 = vcmp.le.f32.partialorder %v437, %v443
  %v445 = vsel %vm444, %v439, 16
  %v446 = vsel %vm440, %v445, 2147483647
  %v447 = vand.u32 %v446, 65535
  %v448 = vshra.s32 %v446, 16
  %v449 = vcvt.s32.f32 %v447
  %v450 = vcvt.s32.f32 %v448
  %451 = vmin.xlane.f32.xlu0 %v450
  %v452 = vpop.xlane.xlu0 %451
  %vm453 = vcmp.eq.f32.partialorder %v450, %v452
  %v454 = vsel %vm453, %v449, inf
  %455 = vmin.xlane.f32.xlu0 %v454
  %v456 = vpop.xlane.xlu0 %455
  %v457 = vcvt.f32.s32 %v456
  %v458 = vcvt.f32.s32 %v452
  %v459 = vshll.u32 %v458, 16
  %v460 = vadd.s32 %v459, %v457
  %vm461 = vcmp.eq.s32.totalorder %v439, %v460
  %v462 = vsel %vm461, 1, 0
  %v463 = vcvt.s32.f32 %v462
  %v464 = vmul.f32 %v463, %v434
  %v465 = vsel %vm440, %v464, 0.0
  %466 = vadd.xlane.f32.xlu0 %v465
  %v467 = vpop.xlane.xlu0 %466
  %v468 = vsub.f32 %v467, %v421
  %v469 = vmul.f32 %v468, %v468
  %v470 = vld [vmem:[%s10] sm:$0xff]
  %v471 = vld [vmem:[%s10 + $0x8] sm:$0xff]
  %v473 = vsel %vm440, %v463, 0
  %475 = vmatprep.subr.mxu0 0.0
  %476 = vmatpush1.msra.mxu0 0.0
  %477 = vmatprep.subr.mxu0 0.0
  %478 = vmatpush1.msra.mxu0 0.0
  %479 = vmatprep.subr.mxu0 0.0
  %480 = vmatpush1.msra.mxu0 0.0
  %481 = vmatprep.subr.mxu0 0.0
  %482 = vmatpush1.msra.mxu0 0.0
  %483 = vmatprep.subr.mxu0 0.0
  %484 = vmatpush1.msra.mxu0 0.0
  %485 = vmatprep.subr.mxu0 0.0
  %486 = vmatpush1.msra.mxu0 0.0
  %487 = vmatprep.subr.mxu0 0.0
  %488 = vmatpush1.msra.mxu0 0.0
  %489 = vmatprep.subr.mxu0 0.0
  %490 = vmatpush1.msra.mxu0 0.0
  %491 = vmatprep.subr.mxu0 0.0
  %492 = vmatpush1.msra.mxu0 0.0
  %493 = vmatprep.subr.mxu0 0.0
  %494 = vmatpush1.msra.mxu0 0.0
  %495 = vmatprep.subr.mxu0 0.0
  %496 = vmatpush1.msra.mxu0 0.0
  %497 = vmatprep.subr.mxu0 0.0
  %498 = vmatpush1.msra.mxu0 0.0
  %499 = vmatprep.subr.mxu0 0.0
  %500 = vmatpush1.msra.mxu0 0.0
  %501 = vmatprep.subr.mxu0 0.0
  %502 = vmatpush1.msra.mxu0 0.0
  %503 = vmatprep.subr.mxu0 0.0
  %504 = vmatpush1.msra.mxu0 %v471
  %505 = vmatprep.subr.mxu0 0.0
  %506 = vmatpush1.msra.mxu0 %v470
  %507 = vmatprep.subr.mxu0 0.0
  %508 = vmatpush2.msra.mxu0 0.0
  %509 = vmatprep.subr.mxu0 0.0
  %510 = vmatpush2.msra.mxu0 0.0
  %511 = vmatprep.subr.mxu0 0.0
  %512 = vmatpush2.msra.mxu0 0.0
  %513 = vmatprep.subr.mxu0 0.0
  %514 = vmatpush2.msra.mxu0 0.0
  %515 = vmatprep.subr.mxu0 0.0
  %516 = vmatpush2.msra.mxu0 0.0
  %517 = vmatprep.subr.mxu0 0.0
  %518 = vmatpush2.msra.mxu0 0.0
  %519 = vmatprep.subr.mxu0 0.0
  %520 = vmatpush2.msra.mxu0 0.0
  %521 = vmatprep.subr.mxu0 0.0
  %522 = vmatpush2.msra.mxu0 0.0
  %523 = vmatprep.subr.mxu0 0.0
  %524 = vmatpush2.msra.mxu0 0.0
  %525 = vmatprep.subr.mxu0 0.0
  %526 = vmatpush2.msra.mxu0 0.0
  %527 = vmatprep.subr.mxu0 0.0
  %528 = vmatpush2.msra.mxu0 0.0
  %529 = vmatprep.subr.mxu0 0.0
  %530 = vmatpush2.msra.mxu0 0.0
  %531 = vmatprep.subr.mxu0 0.0
  %532 = vmatpush2.msra.mxu0 0.0
  %533 = vmatprep.subr.mxu0 0.0
  %534 = vmatpush2.msra.mxu0 0.0
  %535 = vmatprep.subr.mxu0 0.0
  %536 = vmatpush2.msra.mxu0 0.0
  %537 = vmatprep.subr.mxu0 0.0
  %538 = vmatpush2.msra.mxu0 0.0
  %539 = vmatprep.mubr.f32.mxu0 0.0
  %540 = vmatmul.mubr.f32.gmra.mxu0 %v473
  %v541 = vpop.f32.mrf.mxu0
  %v542 = vadd.f32 0.0, %v541
  %v543 = vpop.f32.mrf.mxu0
  %544 = vdwg.mxu0
  %v545 = vmul.f32 %v52, %v52
  %v546 = vsel %vm75, %v545, 0.0
  %547 = vadd.xlane.f32.xlu0 %v546
  %v548 = vpop.xlane.xlu0 %547
  %v549 = vmul.f32 %v542, %v542
  %v550 = vsel %vm75, %v549, 0.0
  %551 = vadd.xlane.f32.xlu0 %v550
  %v552 = vpop.xlane.xlu0 %551
  %v553 = vmul.f32 %v52, %v542
  %v554 = vsel %vm75, %v553, 0.0
  %555 = vadd.xlane.f32.xlu0 %v554
  %v556 = vpop.xlane.xlu0 %555
  %v557 = vadd.f32 %v548, %v552
  %v558 = vmul.f32 %v556, 2.0
  %v559 = vsub.f32 %v557, %v558
  %v560 = vmax.f32 %v559, 0.0
  %v561 = vrsqrt.pop %v560
  %v562 = vmul.f32 %v560, %v561
  %vm563 = vcmp.eq.f32.partialorder %v560, inf
  %v564 = vsel %vm563, %v560, %v562
  %vm565 = vcmp.eq.f32.partialorder %v560, 0.0
  %v566 = vand.u32 %v560, 2147483648
  %v567 = vsel %vm565, %v566, %v564
  %v568 = vrsqrt.pop %v548
  %v569 = vmul.f32 %v548, %v568
  %vm570 = vcmp.eq.f32.partialorder %v548, inf
  %v571 = vsel %vm570, %v548, %v569
  %vm572 = vcmp.eq.f32.partialorder %v548, 0.0
  %v573 = vand.u32 %v548, 2147483648
  %v574 = vsel %vm572, %v573, %v571
  %v575 = vadd.f32 %v574, 1e-12
  %v576 = vrcp.pop %v575
  %v577 = vmul.f32 %v567, %v576
  %v578 = vmax.f32 %v548, 1e-16
  %v579 = vrsqrt.pop %v578
  %v580 = vmax.f32 %v552, 1e-16
  %v581 = vrsqrt.pop %v580
  %v582 = vmul.f32 %v556, %v579
  %v583 = vmul.f32 %v582, %v581
  %v584 = vld [vmem:[%s11] sm:$0x7]
  %v585 = vlaneseq
  %v586 = vshrl.u32 %v585, 7
  %v587 = vsub.s32 0, %v586
  %v588 = vrot.slane %v584, %v587
  %v589 = vmul.f32 %v467, %v588
  %v590 = vlaneseq
  %v591 = vshrl.u32 %v590, 7
  %v592 = vsub.s32 1, %v591
  %v593 = vrot.slane %v584, %v592
  %v594 = vmul.f32 %v577, %v593
  %v595 = vadd.f32 %v589, %v594
  %v596 = vlaneseq
  %v597 = vshrl.u32 %v596, 7
  %v598 = vsub.s32 2, %v597
  %v599 = vrot.slane %v584, %v598
  %v600 = vmul.f32 %v583, %v599
  %v601 = vadd.f32 %v595, %v600
  %v602 = vld [vmem:[%s12] sm:$0x1]
  %v604 = vlaneseq
  %v605 = vshrl.u32 %v604, 7
  %v606 = vsub.s32 0, %v605
  %v607 = vrot.slane %v602, %v606
  %v609 = vadd.f32 %v601, %v607
  %v610 = vtanh.pop %v609
  %v611 = vld [vmem:[%s13] sm:$0xff]
  %v612 = vld [vmem:[%s13 + $0x8] sm:$0x3]
  %v613 = vld [vmem:[%s14] sm:$0x1]
  %v615 = vlaneseq
  %v616 = vshrl.u32 %v615, 7
  %v617 = vsub.s32 0, %v616
  %v618 = vrot.slane %v613, %v617
  %v621 = vsel %vm346, %v610, 0
  %v624 = vsel %vm350, %v612, 0
  %626 = vmatprep.subr.mxu0 0.0
  %627 = vmatpush1.msra.mxu0 0.0
  %628 = vmatprep.subr.mxu0 0.0
  %629 = vmatpush1.msra.mxu0 0.0
  %630 = vmatprep.subr.mxu0 0.0
  %631 = vmatpush1.msra.mxu0 0.0
  %632 = vmatprep.subr.mxu0 0.0
  %633 = vmatpush1.msra.mxu0 0.0
  %634 = vmatprep.subr.mxu0 0.0
  %635 = vmatpush1.msra.mxu0 0.0
  %636 = vmatprep.subr.mxu0 0.0
  %637 = vmatpush1.msra.mxu0 0.0
  %638 = vmatprep.subr.mxu0 0.0
  %639 = vmatpush1.msra.mxu0 0.0
  %640 = vmatprep.subr.mxu0 0.0
  %641 = vmatpush1.msra.mxu0 0.0
  %642 = vmatprep.subr.mxu0 0.0
  %643 = vmatpush1.msra.mxu0 0.0
  %644 = vmatprep.subr.mxu0 0.0
  %645 = vmatpush1.msra.mxu0 0.0
  %646 = vmatprep.subr.mxu0 0.0
  %647 = vmatpush1.msra.mxu0 0.0
  %648 = vmatprep.subr.mxu0 0.0
  %649 = vmatpush1.msra.mxu0 0.0
  %650 = vmatprep.subr.mxu0 0.0
  %651 = vmatpush1.msra.mxu0 0.0
  %652 = vmatprep.subr.mxu0 0.0
  %653 = vmatpush1.msra.mxu0 0.0
  %654 = vmatprep.subr.mxu0 0.0
  %655 = vmatpush1.msra.mxu0 %v624
  %656 = vmatprep.subr.mxu0 0.0
  %657 = vmatpush1.msra.mxu0 %v611
  %658 = vmatprep.subr.mxu0 0.0
  %659 = vmatpush2.msra.mxu0 0.0
  %660 = vmatprep.subr.mxu0 0.0
  %661 = vmatpush2.msra.mxu0 0.0
  %662 = vmatprep.subr.mxu0 0.0
  %663 = vmatpush2.msra.mxu0 0.0
  %664 = vmatprep.subr.mxu0 0.0
  %665 = vmatpush2.msra.mxu0 0.0
  %666 = vmatprep.subr.mxu0 0.0
  %667 = vmatpush2.msra.mxu0 0.0
  %668 = vmatprep.subr.mxu0 0.0
  %669 = vmatpush2.msra.mxu0 0.0
  %670 = vmatprep.subr.mxu0 0.0
  %671 = vmatpush2.msra.mxu0 0.0
  %672 = vmatprep.subr.mxu0 0.0
  %673 = vmatpush2.msra.mxu0 0.0
  %674 = vmatprep.subr.mxu0 0.0
  %675 = vmatpush2.msra.mxu0 0.0
  %676 = vmatprep.subr.mxu0 0.0
  %677 = vmatpush2.msra.mxu0 0.0
  %678 = vmatprep.subr.mxu0 0.0
  %679 = vmatpush2.msra.mxu0 0.0
  %680 = vmatprep.subr.mxu0 0.0
  %681 = vmatpush2.msra.mxu0 0.0
  %682 = vmatprep.subr.mxu0 0.0
  %683 = vmatpush2.msra.mxu0 0.0
  %684 = vmatprep.subr.mxu0 0.0
  %685 = vmatpush2.msra.mxu0 0.0
  %686 = vmatprep.subr.mxu0 0.0
  %687 = vmatpush2.msra.mxu0 0.0
  %688 = vmatprep.subr.mxu0 0.0
  %689 = vmatpush2.msra.mxu0 0.0
  %690 = vmatprep.mubr.f32.mxu0 0.0
  %691 = vmatmul.mubr.f32.gmra.mxu0 %v621
  %v692 = vpop.f32.mrf.mxu0
  %v693 = vadd.f32 %v618, %v692
  %v694 = vpop.f32.mrf.mxu0
  %695 = vdwg.mxu0
  %vm696 = vcmask 15360
  %v697 = vsel %vm696, %v693, -inf
  %698 = vmax.xlane.f32.xlu0 %v697
  %v699 = vpop.xlane.xlu0 %698
  %v700 = vsub.f32 %v693, %v699
  %v701 = vmul.f32 %v700, 1.442695
  %v702 = vpow.pop %v701
  %v703 = vsel %vm696, %v702, 0.0
  %704 = vadd.xlane.f32.xlu0 %v703
  %v705 = vpop.xlane.xlu0 %704
  %v706 = vrcp.pop %v705
  %v707 = vmul.f32 %v702, %v706
  %708 = vrot.lane.b32.xlu0 %v421, 118
  %v709 = vpop.permute.xlu0 %708
  %712 = vrot.lane.b32.xlu0 %v707, 122
  %v713 = vpop.permute.xlu0 %712
  %716 = vrot.lane.b32.xlu0 %v469, 124
  %v717 = vpop.permute.xlu0 %716
  %v719 = vsel %vm75, %v542, %v709
  %vm720 = vcmask 973824
  %v721 = vsel %vm720, %v719, %v467
  %vm722 = vcmask 982016
  %v723 = vsel %vm722, %v721, %v577
  %vm724 = vcmask 990208
  %v725 = vsel %vm724, %v723, %v583
  %vm726 = vcmask 998400
  %v727 = vsel %vm726, %v725, %v713
  %vm728 = vcmask 1014784
  %v729 = vsel %vm728, %v727, %v717
  %vm730 = vcmask 1022976
  %v731 = vsel %vm730, %v729, 0.0
  %732 = vst [vmem:[%s15] sm:$0xff] %v731
  // Predicated region
  $region62: #{dagmm_vqvae_forward.1} parent=0 // pred_check
    _
  $region63: #{dagmm_vqvae_forward.1} parent=0 // pred_check_branch
    %734 = sbr.rel (0) target = $region65
  $region64: #{dagmm_vqvae_forward.1} parent=0 // pred_region
    _
  $region65: #{dagmm_vqvae_forward.1} parent=0 // pred_fallthru
    _
  // Predicated region
  $region66: #{dagmm_vqvae_forward.1} parent=0 // pred_check
    _
  $region67: #{dagmm_vqvae_forward.1} parent=0 // pred_check_branch
    %736 = sbr.rel (0) target = $region69
  $region68: #{dagmm_vqvae_forward.1} parent=0 // pred_region
    _
  $region69: #{dagmm_vqvae_forward.1} parent=0 // pred_fallthru
    _

</llo_original>
